<compile_context>
chip_gen: v6e
topology: v6e:2x2x1
jax: 0.10.0
libtpu: 0.0.40
codegen_flags: <defaults>
</compile_context>

<pallas_src>
import jax
import jax.numpy as jnp
import numpy as np
from jax.experimental import pallas as pl
from jax.experimental.pallas import tpu as pltpu


def senet_kernel(x_ref, w1_ref, b1_ref, w2_ref, b2_ref, out_ref):
    # x_ref / out_ref : (Nb, H*W, C)   channels-last, lane-dense (C == 128)
    # w1_ref          : (C, Cmid)      squeeze 1x1-conv weight
    # b1_ref          : (1, Cmid)
    # w2_ref          : (Cmid, C)      excite 1x1-conv weight
    # b2_ref          : (1, C)
    x = x_ref[...]                                    # (Nb, HW, C) f32

    # ---- global average pool over spatial (H*W) ----
    inv_hw = jnp.float32(1.0 / x_ref.shape[1])
    pooled = jnp.sum(x, axis=1) * inv_hw              # (Nb, C)

    # ---- squeeze: 1x1 conv == dense layer, then ReLU ----
    h = jnp.dot(pooled, w1_ref[...],
                preferred_element_type=jnp.float32) + b1_ref[...]
    h = jnp.maximum(h, 0.0)                           # (Nb, Cmid)

    # ---- excite: 1x1 conv == dense layer, then sigmoid ----
    logits = jnp.dot(h, w2_ref[...],
                     preferred_element_type=jnp.float32) + b2_ref[...]
    att = 1.0 / (1.0 + jnp.exp(-logits))              # (Nb, C), exp on EUP

    # ---- channel-wise rescale of the input ----
    out_ref[...] = (x * att[:, None, :]).astype(out_ref.dtype)


def _pick_batch_block(n, hw, c, budget_bytes):
    """Largest divisor of n whose (in+out, double-buffered) block fits budget."""
    per_item = hw * c * 4 * 4          # f32, input + output, 2x buffered
    nb = max(1, min(n, budget_bytes // max(per_item, 1)))
    while n % nb:
        nb -= 1
    return nb


def senet_forward(x_nchw, w1, b1, w2, b2, *, vmem_budget_bytes=8 * 1024 * 1024):
    """SENet forward.

    x_nchw : (N, C, H, W) float32
    w1     : (Cmid, C)  weight of Conv2d(C, Cmid, 1) with the 1x1 squeezed out
    b1     : (Cmid,)
    w2     : (C, Cmid)  weight of Conv2d(Cmid, C, 1) with the 1x1 squeezed out
    b2     : (C,)
    """
    N, C, H, W = x_nchw.shape
    Cmid = w1.shape[0]
    HW = H * W

    # NCHW -> (N, H*W, C): channels on the lane axis, done once in the wrapper.
    x = jnp.transpose(x_nchw, (0, 2, 3, 1)).reshape(N, HW, C).astype(jnp.float32)

    w1k = jnp.transpose(w1).astype(jnp.float32)        # (C, Cmid)
    b1k = b1.reshape(1, Cmid).astype(jnp.float32)
    w2k = jnp.transpose(w2).astype(jnp.float32)        # (Cmid, C)
    b2k = b2.reshape(1, C).astype(jnp.float32)

    nb = _pick_batch_block(N, HW, C, vmem_budget_bytes)
    grid = (N // nb,)

    out = pl.pallas_call(
        senet_kernel,
        out_shape=jax.ShapeDtypeStruct((N, HW, C), jnp.float32),
        grid_spec=pltpu.PrefetchScalarGridSpec(
            num_scalar_prefetch=0,
            grid=grid,
            in_specs=[
                pl.BlockSpec((nb, HW, C), lambda n: (n, 0, 0)),
                pl.BlockSpec((C, Cmid), lambda n: (0, 0)),
                pl.BlockSpec((1, Cmid), lambda n: (0, 0)),
                pl.BlockSpec((Cmid, C), lambda n: (0, 0)),
                pl.BlockSpec((1, C), lambda n: (0, 0)),
            ],
            out_specs=pl.BlockSpec((nb, HW, C), lambda n: (n, 0, 0)),
        ),
        compiler_params=pltpu.CompilerParams(
            # batch items are independent -> shard across TCs on v7x
            dimension_semantics=("parallel",)),
    )(x, w1k, b1k, w2k, b2k)

    # (N, H*W, C) -> NCHW
    return jnp.transpose(out.reshape(N, H, W, C), (0, 3, 1, 2))


def ref_forward(x_nchw, w1, b1, w2, b2):
    """Pure-JAX reference matching the PyTorch SENet forward."""
    pooled = jnp.mean(x_nchw, axis=(2, 3))                      # (N, C)
    h = jnp.maximum(pooled @ w1.T + b1, 0.0)                    # (N, Cmid)
    att = jax.nn.sigmoid(h @ w2.T + b2)                         # (N, C)
    return x_nchw * att[:, :, None, None]


if __name__ == "__main__":
    # Small deterministic setup. squeeze=16 requires C >= 16; C=128 also makes
    # the kernel lane-dense (128 lanes) so pick N=2, C=128, H=W=16, Cmid=8.
    N, C, H, W = 2, 128, 16, 16
    squeeze = 16
    Cmid = C // squeeze

    key = jax.random.PRNGKey(0)
    kx, kw1, kb1, kw2, kb2 = jax.random.split(key, 5)

    x = jax.random.normal(kx, (N, C, H, W), dtype=jnp.float32)

    # PyTorch Conv2d default init: uniform(+-1/sqrt(fan_in)), fan_in = Cin*1*1.
    bound1 = 1.0 / np.sqrt(C)
    w1 = jax.random.uniform(kw1, (Cmid, C), jnp.float32, -bound1, bound1)
    b1 = jax.random.uniform(kb1, (Cmid,), jnp.float32, -bound1, bound1)
    bound2 = 1.0 / np.sqrt(Cmid)
    w2 = jax.random.uniform(kw2, (C, Cmid), jnp.float32, -bound2, bound2)
    b2 = jax.random.uniform(kb2, (C,), jnp.float32, -bound2, bound2)

    out = senet_forward(x, w1, b1, w2, b2)
    out = jax.block_until_ready(out)

    ref = jax.block_until_ready(ref_forward(x, w1, b1, w2, b2))
    np.testing.assert_allclose(np.asarray(out), np.asarray(ref),
                               rtol=1e-3, atol=1e-3)

    print("KERNEL_OK")
</pallas_src>

<mosaic_0001>
module attributes {stable_mosaic.version = 11 : i64} {
  func.func @senet_kernel(%arg0: i32, %arg1: memref<2x256x128xf32, #tpu.memory_space<vmem>>, %arg2: memref<128x8xf32, #tpu.memory_space<vmem>>, %arg3: memref<1x8xf32, #tpu.memory_space<vmem>>, %arg4: memref<8x128xf32, #tpu.memory_space<vmem>>, %arg5: memref<1x128xf32, #tpu.memory_space<vmem>>, %arg6: memref<2x256x128xf32, #tpu.memory_space<vmem>>) attributes {dimension_semantics = [#tpu.dimension_semantics<parallel>], iteration_bounds = array<i64: 1>, scalar_prefetch = 0 : i64, scratch_operands = 0 : i64, tpu.core_type = #tpu.core_type<tc>, window_params = [{transform_indices = @transform_0, window_bounds = array<i64: 2, 256, 128>}, {pipeline_mode = #tpu.pipeline_mode<synchronous>, transform_indices = @transform_1, window_bounds = array<i64: 128, 8>}, {pipeline_mode = #tpu.pipeline_mode<synchronous>, transform_indices = @transform_2, window_bounds = array<i64: 1, 8>}, {pipeline_mode = #tpu.pipeline_mode<synchronous>, transform_indices = @transform_3, window_bounds = array<i64: 8, 128>}, {pipeline_mode = #tpu.pipeline_mode<synchronous>, transform_indices = @transform_4, window_bounds = array<i64: 1, 128>}, {transform_indices = @transform_5, window_bounds = array<i64: 2, 256, 128>}]} {
    %c0 = arith.constant 0 : index
    %c0_0 = arith.constant 0 : index
    %c0_1 = arith.constant 0 : index
    %0 = vector.load %arg1[%c0, %c0_0, %c0_1] : memref<2x256x128xf32, #tpu.memory_space<vmem>>, vector<2x256x128xf32>
    %cst = arith.constant dense<0.000000e+00> : vector<2x128xf32>
    %1 = vector.multi_reduction <add>, %0, %cst [1] : vector<2x256x128xf32> to vector<2x128xf32>
    %cst_2 = arith.constant 3.906250e-03 : f32
    %2 = vector.broadcast %cst_2 : f32 to vector<2x128xf32>
    %3 = arith.mulf %1, %2 : vector<2x128xf32>
    %c0_3 = arith.constant 0 : index
    %c0_4 = arith.constant 0 : index
    %4 = vector.load %arg2[%c0_3, %c0_4] : memref<128x8xf32, #tpu.memory_space<vmem>>, vector<128x8xf32>
    %cst_5 = arith.constant dense<0.000000e+00> : vector<2x8xf32>
    %5 = tpu.matmul %3, %4, %cst_5 {dimension_numbers = #tpu.dot_dimension_numbers<[1], [0], [0], [1], [0, 0, 1, 1], [], []>} : vector<2x128xf32>, vector<128x8xf32>, vector<2x8xf32> -> vector<2x8xf32>
    %c0_6 = arith.constant 0 : index
    %c0_7 = arith.constant 0 : index
    %6 = vector.load %arg3[%c0_6, %c0_7] : memref<1x8xf32, #tpu.memory_space<vmem>>, vector<1x8xf32>
    %7 = vector.broadcast %6 : vector<1x8xf32> to vector<2x8xf32>
    %8 = arith.addf %5, %7 : vector<2x8xf32>
    %cst_8 = arith.constant 0.000000e+00 : f32
    %9 = vector.broadcast %cst_8 : f32 to vector<2x8xf32>
    %10 = arith.maximumf %8, %9 : vector<2x8xf32>
    %c0_9 = arith.constant 0 : index
    %c0_10 = arith.constant 0 : index
    %11 = vector.load %arg4[%c0_9, %c0_10] : memref<8x128xf32, #tpu.memory_space<vmem>>, vector<8x128xf32>
    %cst_11 = arith.constant dense<0.000000e+00> : vector<2x128xf32>
    %12 = tpu.matmul %10, %11, %cst_11 {dimension_numbers = #tpu.dot_dimension_numbers<[1], [0], [0], [1], [0, 0, 1, 1], [], []>} : vector<2x8xf32>, vector<8x128xf32>, vector<2x128xf32> -> vector<2x128xf32>
    %c0_12 = arith.constant 0 : index
    %c0_13 = arith.constant 0 : index
    %13 = vector.load %arg5[%c0_12, %c0_13] : memref<1x128xf32, #tpu.memory_space<vmem>>, vector<1x128xf32>
    %14 = vector.broadcast %13 : vector<1x128xf32> to vector<2x128xf32>
    %15 = arith.addf %12, %14 : vector<2x128xf32>
    %cst_14 = arith.constant 0.000000e+00 : f32
    %16 = vector.broadcast %cst_14 : f32 to vector<2x128xf32>
    %17 = arith.subf %16, %15 : vector<2x128xf32>
    %18 = math.exp %17 : vector<2x128xf32>
    %cst_15 = arith.constant 1.000000e+00 : f32
    %19 = vector.broadcast %cst_15 : f32 to vector<2x128xf32>
    %20 = arith.addf %19, %18 : vector<2x128xf32>
    %cst_16 = arith.constant 1.000000e+00 : f32
    %21 = vector.broadcast %cst_16 : f32 to vector<2x128xf32>
    %22 = arith.divf %21, %20 : vector<2x128xf32>
    %23 = vector.shape_cast %22 : vector<2x128xf32> to vector<2x1x128xf32>
    %24 = vector.broadcast %23 : vector<2x1x128xf32> to vector<2x256x128xf32>
    %25 = arith.mulf %0, %24 : vector<2x256x128xf32>
    %c0_17 = arith.constant 0 : index
    %c0_18 = arith.constant 0 : index
    %c0_19 = arith.constant 0 : index
    %26 = vector.load %arg6[%c0_17, %c0_18, %c0_19] : memref<2x256x128xf32, #tpu.memory_space<vmem>>, vector<2x256x128xf32>
    tpu.vector_store %arg6[%c0_17, %c0_18, %c0_19], %25 {strides = array<i32>} : memref<2x256x128xf32, #tpu.memory_space<vmem>>, vector<2x256x128xf32>,
    return
  }
  func.func @transform_0(%arg0: i32) -> (i32, i32, i32) {
    %c0_i32 = arith.constant 0 : i32
    %c0_i32_0 = arith.constant 0 : i32
    %c0_i32_1 = arith.constant 0 : i32
    return %arg0, %c0_i32, %c0_i32_0 : i32, i32, i32
  }
  func.func @transform_1(%arg0: i32) -> (i32, i32) {
    %c0_i32 = arith.constant 0 : i32
    %c0_i32_0 = arith.constant 0 : i32
    %c0_i32_1 = arith.constant 0 : i32
    return %c0_i32, %c0_i32_0 : i32, i32
  }
  func.func @transform_2(%arg0: i32) -> (i32, i32) {
    %c0_i32 = arith.constant 0 : i32
    %c0_i32_0 = arith.constant 0 : i32
    %c0_i32_1 = arith.constant 0 : i32
    return %c0_i32, %c0_i32_0 : i32, i32
  }
  func.func @transform_3(%arg0: i32) -> (i32, i32) {
    %c0_i32 = arith.constant 0 : i32
    %c0_i32_0 = arith.constant 0 : i32
    %c0_i32_1 = arith.constant 0 : i32
    return %c0_i32, %c0_i32_0 : i32, i32
  }
  func.func @transform_4(%arg0: i32) -> (i32, i32) {
    %c0_i32 = arith.constant 0 : i32
    %c0_i32_0 = arith.constant 0 : i32
    %c0_i32_1 = arith.constant 0 : i32
    return %c0_i32, %c0_i32_0 : i32, i32
  }
  func.func @transform_5(%arg0: i32) -> (i32, i32, i32) {
    %c0_i32 = arith.constant 0 : i32
    %c0_i32_0 = arith.constant 0 : i32
    %c0_i32_1 = arith.constant 0 : i32
    return %arg0, %c0_i32, %c0_i32_0 : i32, i32, i32
  }
}

</mosaic_0001>

<llo_original>
// kernel: tpu_custom_call.1
$region0: #{tpu_custom_call.1}
  #allocation0 [shape = 'u32[]', space=smem, size = 0x4, offset = 0x4, fixed_abs, tag = 'smem constant byte address 0x4 - core index']
  #allocation1 [shape = 'u32[144,128]{1,0:T(1,128)}', space=vmem, size = 0x12000, scoped, tag = 'internal scratch']
  %s0 = inlined_call_operand.hbm [shape: f32[2,256,128], index: 0, kind: input, shape index: {}]
  %s1 = inlined_call_operand.vmem [shape: f32[128,8], index: 1, kind: input, shape index: {}]
  %s2 = inlined_call_operand.vmem [shape: f32[1,8], index: 2, kind: input, shape index: {}]
  %s3 = inlined_call_operand.vmem [shape: f32[8,128], index: 3, kind: input, shape index: {}]
  %s4 = inlined_call_operand.vmem [shape: f32[1,128], index: 4, kind: input, shape index: {}]
  %s5 = inlined_call_operand.hbm [shape: f32[2,256,128], index: 5, kind: output, shape index: {}]
  %s6 = sld [smem:[#allocation0]]
  $region34: #{tpu_custom_call.1} parent=0
    _
  %s8 = ssub.s32 1, %s6
  %s9 = scalar_select 0, %s8, %s6
  $region1: #{tpu_custom_call.1} parent=0
    #allocation2 [shape = 'u8[262144]{0}', space=vmem, size = 0x40000, scoped, tag = 'input window, operand 0, single buffered']
    #allocation3 [shape = 's32[1]{0}', space=sflag, size = 0x4, scoped, tag = 'scoped memory for tpu_custom_call.1']
    #allocation4 [shape = 's32[1]{0}', space=sflag, size = 0x4, scoped, tag = 'scoped memory for tpu_custom_call.1']
    #allocation5 [shape = 'u8[262144]{0}', space=vmem, size = 0x40000, scoped, tag = 'output window, operand 0, single buffered']
    %10 = vsyncpa [#allocation3], 0
    %11 = vsyncpa [#allocation4], 0
    // Predicated region
    $region2: #{tpu_custom_call.1} parent=1 // pred_check
      _
    $region3: #{tpu_custom_call.1} parent=1 // pred_check_branch
      %13 = sbr.rel (0) target = $region5
    $region4: #{tpu_custom_call.1} parent=1 // pred_region
      %s15 = ssub.s32 8192, 8192
      %16 = vsyncadd [#allocation3], %s15
      %s17 = sshll.u32 [#allocation2], 4
      %s18 = int_to_ptr.vmem [resolvable:$true] %s17
      %23 = dma.hbm_to_vmem [thread:$0]  %s0, 8192, %s18, [#allocation3], 128, 128, 8
    $region5: #{tpu_custom_call.1} parent=1 // pred_fallthru
      _
    // Predicated region
    $region6: #{tpu_custom_call.1} parent=1 // pred_check
      _
    $region7: #{tpu_custom_call.1} parent=1 // pred_check_branch
      %25 = sbr.rel (0) target = $region9
    $region8: #{tpu_custom_call.1} parent=1 // pred_region
      _
    $region9: #{tpu_custom_call.1} parent=1 // pred_fallthru
      _
    // Predicated region
    $region10: #{tpu_custom_call.1} parent=1 // pred_check
      _
    $region11: #{tpu_custom_call.1} parent=1 // pred_check_branch
      %27 = sbr.rel (0) target = $region13
    $region12: #{tpu_custom_call.1} parent=1 // pred_region
      _
    $region13: #{tpu_custom_call.1} parent=1 // pred_fallthru
      _
    // Predicated region
    $region14: #{tpu_custom_call.1} parent=1 // pred_check
      _
    $region15: #{tpu_custom_call.1} parent=1 // pred_check_branch
      %29 = sbr.rel (0) target = $region17
    $region16: #{tpu_custom_call.1} parent=1 // pred_region
      _
    $region17: #{tpu_custom_call.1} parent=1 // pred_fallthru
      _
    // Predicated region
    $region18: #{tpu_custom_call.1} parent=1 // pred_check
      _
    $region19: #{tpu_custom_call.1} parent=1 // pred_check_branch
      %31 = sbr.rel (0) target = $region21
    $region20: #{tpu_custom_call.1} parent=1 // pred_region
      _
    $region21: #{tpu_custom_call.1} parent=1 // pred_fallthru
      _
    // Predicated region
    $region22: #{tpu_custom_call.1} parent=1 // pred_check
      _
    $region23: #{tpu_custom_call.1} parent=1 // pred_check_branch
      %33 = sbr.rel (0) target = $region25
    $region24: #{tpu_custom_call.1} parent=1 // pred_region
      %34 = dma.done [#allocation3], 8192
    $region25: #{tpu_custom_call.1} parent=1 // pred_fallthru
      _
    %v35 = vld [vmem:[#allocation2] sm:$0xff]
    %v36 = vld [vmem:[#allocation2 + $0x8] sm:$0xff]
    %v37 = vld [vmem:[#allocation2 + $0x10] sm:$0xff]
    %v38 = vld [vmem:[#allocation2 + $0x18] sm:$0xff]
    %v39 = vld [vmem:[#allocation2 + $0x20] sm:$0xff]
    %v40 = vld [vmem:[#allocation2 + $0x28] sm:$0xff]
    %v41 = vld [vmem:[#allocation2 + $0x30] sm:$0xff]
    %v42 = vld [vmem:[#allocation2 + $0x38] sm:$0xff]
    %v43 = vld [vmem:[#allocation2 + $0x40] sm:$0xff]
    %v44 = vld [vmem:[#allocation2 + $0x48] sm:$0xff]
    %v45 = vld [vmem:[#allocation2 + $0x50] sm:$0xff]
    %v46 = vld [vmem:[#allocation2 + $0x58] sm:$0xff]
    %v47 = vld [vmem:[#allocation2 + $0x60] sm:$0xff]
    %v48 = vld [vmem:[#allocation2 + $0x68] sm:$0xff]
    %v49 = vld [vmem:[#allocation2 + $0x70] sm:$0xff]
    %v50 = vld [vmem:[#allocation2 + $0x78] sm:$0xff]
    %v51 = vld [vmem:[#allocation2 + $0x80] sm:$0xff]
    %v52 = vld [vmem:[#allocation2 + $0x88] sm:$0xff]
    %v53 = vld [vmem:[#allocation2 + $0x90] sm:$0xff]
    %v54 = vld [vmem:[#allocation2 + $0x98] sm:$0xff]
    %v55 = vld [vmem:[#allocation2 + $0xa0] sm:$0xff]
    %v56 = vld [vmem:[#allocation2 + $0xa8] sm:$0xff]
    %v57 = vld [vmem:[#allocation2 + $0xb0] sm:$0xff]
    %v58 = vld [vmem:[#allocation2 + $0xb8] sm:$0xff]
    %v59 = vld [vmem:[#allocation2 + $0xc0] sm:$0xff]
    %v60 = vld [vmem:[#allocation2 + $0xc8] sm:$0xff]
    %v61 = vld [vmem:[#allocation2 + $0xd0] sm:$0xff]
    %v62 = vld [vmem:[#allocation2 + $0xd8] sm:$0xff]
    %v63 = vld [vmem:[#allocation2 + $0xe0] sm:$0xff]
    %v64 = vld [vmem:[#allocation2 + $0xe8] sm:$0xff]
    %v65 = vld [vmem:[#allocation2 + $0xf0] sm:$0xff]
    %v66 = vld [vmem:[#allocation2 + $0xf8] sm:$0xff]
    %v67 = vld [vmem:[#allocation2 + $0x100] sm:$0xff]
    %v68 = vld [vmem:[#allocation2 + $0x108] sm:$0xff]
    %v69 = vld [vmem:[#allocation2 + $0x110] sm:$0xff]
    %v70 = vld [vmem:[#allocation2 + $0x118] sm:$0xff]
    %v71 = vld [vmem:[#allocation2 + $0x120] sm:$0xff]
    %v72 = vld [vmem:[#allocation2 + $0x128] sm:$0xff]
    %v73 = vld [vmem:[#allocation2 + $0x130] sm:$0xff]
    %v74 = vld [vmem:[#allocation2 + $0x138] sm:$0xff]
    %v75 = vld [vmem:[#allocation2 + $0x140] sm:$0xff]
    %v76 = vld [vmem:[#allocation2 + $0x148] sm:$0xff]
    %v77 = vld [vmem:[#allocation2 + $0x150] sm:$0xff]
    %v78 = vld [vmem:[#allocation2 + $0x158] sm:$0xff]
    %v79 = vld [vmem:[#allocation2 + $0x160] sm:$0xff]
    %v80 = vld [vmem:[#allocation2 + $0x168] sm:$0xff]
    %v81 = vld [vmem:[#allocation2 + $0x170] sm:$0xff]
    %v82 = vld [vmem:[#allocation2 + $0x178] sm:$0xff]
    %v83 = vld [vmem:[#allocation2 + $0x180] sm:$0xff]
    %v84 = vld [vmem:[#allocation2 + $0x188] sm:$0xff]
    %v85 = vld [vmem:[#allocation2 + $0x190] sm:$0xff]
    %v86 = vld [vmem:[#allocation2 + $0x198] sm:$0xff]
    %v87 = vld [vmem:[#allocation2 + $0x1a0] sm:$0xff]
    %v88 = vld [vmem:[#allocation2 + $0x1a8] sm:$0xff]
    %v89 = vld [vmem:[#allocation2 + $0x1b0] sm:$0xff]
    %v90 = vld [vmem:[#allocation2 + $0x1b8] sm:$0xff]
    %v91 = vld [vmem:[#allocation2 + $0x1c0] sm:$0xff]
    %v92 = vld [vmem:[#allocation2 + $0x1c8] sm:$0xff]
    %v93 = vld [vmem:[#allocation2 + $0x1d0] sm:$0xff]
    %v94 = vld [vmem:[#allocation2 + $0x1d8] sm:$0xff]
    %v95 = vld [vmem:[#allocation2 + $0x1e0] sm:$0xff]
    %v96 = vld [vmem:[#allocation2 + $0x1e8] sm:$0xff]
    %v97 = vld [vmem:[#allocation2 + $0x1f0] sm:$0xff]
    %v98 = vld [vmem:[#allocation2 + $0x1f8] sm:$0xff]
    %v99 = vadd.f32 %v35, %v36
    %v100 = vadd.f32 %v99, %v37
    %v101 = vadd.f32 %v100, %v38
    %v102 = vadd.f32 %v101, %v39
    %v103 = vadd.f32 %v102, %v40
    %v104 = vadd.f32 %v103, %v41
    %v105 = vadd.f32 %v104, %v42
    %v106 = vadd.f32 %v105, %v43
    %v107 = vadd.f32 %v106, %v44
    %v108 = vadd.f32 %v107, %v45
    %v109 = vadd.f32 %v108, %v46
    %v110 = vadd.f32 %v109, %v47
    %v111 = vadd.f32 %v110, %v48
    %v112 = vadd.f32 %v111, %v49
    %v113 = vadd.f32 %v112, %v50
    %v114 = vadd.f32 %v113, %v51
    %v115 = vadd.f32 %v114, %v52
    %v116 = vadd.f32 %v115, %v53
    %v117 = vadd.f32 %v116, %v54
    %v118 = vadd.f32 %v117, %v55
    %v119 = vadd.f32 %v118, %v56
    %v120 = vadd.f32 %v119, %v57
    %v121 = vadd.f32 %v120, %v58
    %v122 = vadd.f32 %v121, %v59
    %v123 = vadd.f32 %v122, %v60
    %v124 = vadd.f32 %v123, %v61
    %v125 = vadd.f32 %v124, %v62
    %v126 = vadd.f32 %v125, %v63
    %v127 = vadd.f32 %v126, %v64
    %v128 = vadd.f32 %v127, %v65
    %v129 = vadd.f32 %v128, %v66
    %v130 = vrot.slane %v129, 4
    %v131 = vadd.f32 %v129, %v130
    %v132 = vrot.slane %v131, 2
    %v133 = vadd.f32 %v131, %v132
    %v134 = vrot.slane %v133, 1
    %v135 = vadd.f32 %v133, %v134
    %v136 = vadd.f32 %v67, %v68
    %v137 = vadd.f32 %v136, %v69
    %v138 = vadd.f32 %v137, %v70
    %v139 = vadd.f32 %v138, %v71
    %v140 = vadd.f32 %v139, %v72
    %v141 = vadd.f32 %v140, %v73
    %v142 = vadd.f32 %v141, %v74
    %v143 = vadd.f32 %v142, %v75
    %v144 = vadd.f32 %v143, %v76
    %v145 = vadd.f32 %v144, %v77
    %v146 = vadd.f32 %v145, %v78
    %v147 = vadd.f32 %v146, %v79
    %v148 = vadd.f32 %v147, %v80
    %v149 = vadd.f32 %v148, %v81
    %v150 = vadd.f32 %v149, %v82
    %v151 = vadd.f32 %v150, %v83
    %v152 = vadd.f32 %v151, %v84
    %v153 = vadd.f32 %v152, %v85
    %v154 = vadd.f32 %v153, %v86
    %v155 = vadd.f32 %v154, %v87
    %v156 = vadd.f32 %v155, %v88
    %v157 = vadd.f32 %v156, %v89
    %v158 = vadd.f32 %v157, %v90
    %v159 = vadd.f32 %v158, %v91
    %v160 = vadd.f32 %v159, %v92
    %v161 = vadd.f32 %v160, %v93
    %v162 = vadd.f32 %v161, %v94
    %v163 = vadd.f32 %v162, %v95
    %v164 = vadd.f32 %v163, %v96
    %v165 = vadd.f32 %v164, %v97
    %v166 = vadd.f32 %v165, %v98
    %v167 = vrot.slane %v166, 4
    %v168 = vadd.f32 %v166, %v167
    %v169 = vrot.slane %v168, 2
    %v170 = vadd.f32 %v168, %v169
    %v171 = vrot.slane %v170, 1
    %v172 = vadd.f32 %v170, %v171
    %v173 = vmul.f32 %v135, 0.00390625
    %v174 = vmul.f32 %v172, 0.00390625
    %v175 = vld [vmem:[%s1] sm:$0xff]
    %v176 = vld [vmem:[%s1 + $0x8] sm:$0xff]
    %v177 = vld [vmem:[%s1 + $0x10] sm:$0xff]
    %v178 = vld [vmem:[%s1 + $0x18] sm:$0xff]
    %v179 = vld [vmem:[%s1 + $0x20] sm:$0xff]
    %v180 = vld [vmem:[%s1 + $0x28] sm:$0xff]
    %v181 = vld [vmem:[%s1 + $0x30] sm:$0xff]
    %v182 = vld [vmem:[%s1 + $0x38] sm:$0xff]
    %v183 = vld [vmem:[%s1 + $0x40] sm:$0xff]
    %v184 = vld [vmem:[%s1 + $0x48] sm:$0xff]
    %v185 = vld [vmem:[%s1 + $0x50] sm:$0xff]
    %v186 = vld [vmem:[%s1 + $0x58] sm:$0xff]
    %v187 = vld [vmem:[%s1 + $0x60] sm:$0xff]
    %v188 = vld [vmem:[%s1 + $0x68] sm:$0xff]
    %v189 = vld [vmem:[%s1 + $0x70] sm:$0xff]
    %v190 = vld [vmem:[%s1 + $0x78] sm:$0xff]
    %v191 = vld [vmem:[%s2] sm:$0x1]
    %v193 = vlaneseq
    %v194 = vshrl.u32 %v193, 7
    %v195 = vsub.s32 0, %v194
    %v196 = vrot.slane %v191, %v195
    %vm200 = vcmask 1041409
    %v201 = vsel %vm200, %v174, %v173
    %203 = vmatprep.subr.mxu0 0.0
    %204 = vmatpush1.msra.mxu0 %v190
    %205 = vmatprep.subr.mxu0 0.0
    %206 = vmatpush1.msra.mxu0 %v189
    %207 = vmatprep.subr.mxu0 0.0
    %208 = vmatpush1.msra.mxu0 %v188
    %209 = vmatprep.subr.mxu0 0.0
    %210 = vmatpush1.msra.mxu0 %v187
    %211 = vmatprep.subr.mxu0 0.0
    %212 = vmatpush1.msra.mxu0 %v186
    %213 = vmatprep.subr.mxu0 0.0
    %214 = vmatpush1.msra.mxu0 %v185
    %215 = vmatprep.subr.mxu0 0.0
    %216 = vmatpush1.msra.mxu0 %v184
    %217 = vmatprep.subr.mxu0 0.0
    %218 = vmatpush1.msra.mxu0 %v183
    %219 = vmatprep.subr.mxu0 0.0
    %220 = vmatpush1.msra.mxu0 %v182
    %221 = vmatprep.subr.mxu0 0.0
    %222 = vmatpush1.msra.mxu0 %v181
    %223 = vmatprep.subr.mxu0 0.0
    %224 = vmatpush1.msra.mxu0 %v180
    %225 = vmatprep.subr.mxu0 0.0
    %226 = vmatpush1.msra.mxu0 %v179
    %227 = vmatprep.subr.mxu0 0.0
    %228 = vmatpush1.msra.mxu0 %v178
    %229 = vmatprep.subr.mxu0 0.0
    %230 = vmatpush1.msra.mxu0 %v177
    %231 = vmatprep.subr.mxu0 0.0
    %232 = vmatpush1.msra.mxu0 %v176
    %233 = vmatprep.subr.mxu0 0.0
    %234 = vmatpush1.msra.mxu0 %v175
    %235 = vmatprep.subr.mxu0 0.0
    %236 = vmatpush2.msra.mxu0 0.0
    %237 = vmatprep.subr.mxu0 0.0
    %238 = vmatpush2.msra.mxu0 0.0
    %239 = vmatprep.subr.mxu0 0.0
    %240 = vmatpush2.msra.mxu0 0.0
    %241 = vmatprep.subr.mxu0 0.0
    %242 = vmatpush2.msra.mxu0 0.0
    %243 = vmatprep.subr.mxu0 0.0
    %244 = vmatpush2.msra.mxu0 0.0
    %245 = vmatprep.subr.mxu0 0.0
    %246 = vmatpush2.msra.mxu0 0.0
    %247 = vmatprep.subr.mxu0 0.0
    %248 = vmatpush2.msra.mxu0 0.0
    %249 = vmatprep.subr.mxu0 0.0
    %250 = vmatpush2.msra.mxu0 0.0
    %251 = vmatprep.subr.mxu0 0.0
    %252 = vmatpush2.msra.mxu0 0.0
    %253 = vmatprep.subr.mxu0 0.0
    %254 = vmatpush2.msra.mxu0 0.0
    %255 = vmatprep.subr.mxu0 0.0
    %256 = vmatpush2.msra.mxu0 0.0
    %257 = vmatprep.subr.mxu0 0.0
    %258 = vmatpush2.msra.mxu0 0.0
    %259 = vmatprep.subr.mxu0 0.0
    %260 = vmatpush2.msra.mxu0 0.0
    %261 = vmatprep.subr.mxu0 0.0
    %262 = vmatpush2.msra.mxu0 0.0
    %263 = vmatprep.subr.mxu0 0.0
    %264 = vmatpush2.msra.mxu0 0.0
    %265 = vmatprep.subr.mxu0 0.0
    %266 = vmatpush2.msra.mxu0 0.0
    %267 = vmatprep.mubr.f32.mxu0 0.0
    %268 = vmatmul.mubr.f32.gmra.mxu0 %v201
    %v269 = vpop.f32.mrf.mxu0
    %v270 = vadd.f32 %v196, %v269
    %v271 = vpop.f32.mrf.mxu0
    %272 = vdwg.mxu0
    %v273 = vmax.f32 %v270, 0.0
    %v274 = vld [vmem:[%s3] sm:$0xff]
    %v275 = vld [vmem:[%s4] sm:$0x1]
    %v277 = vlaneseq
    %v278 = vshrl.u32 %v277, 7
    %v279 = vsub.s32 0, %v278
    %v280 = vrot.slane %v275, %v279
    %vm282 = vcmask 64512
    %v284 = vsel %vm282, %v273, 0
    %286 = vmatprep.subr.mxu0 0.0
    %287 = vmatpush1.msra.mxu0 0.0
    %288 = vmatprep.subr.mxu0 0.0
    %289 = vmatpush1.msra.mxu0 0.0
    %290 = vmatprep.subr.mxu0 0.0
    %291 = vmatpush1.msra.mxu0 0.0
    %292 = vmatprep.subr.mxu0 0.0
    %293 = vmatpush1.msra.mxu0 0.0
    %294 = vmatprep.subr.mxu0 0.0
    %295 = vmatpush1.msra.mxu0 0.0
    %296 = vmatprep.subr.mxu0 0.0
    %297 = vmatpush1.msra.mxu0 0.0
    %298 = vmatprep.subr.mxu0 0.0
    %299 = vmatpush1.msra.mxu0 0.0
    %300 = vmatprep.subr.mxu0 0.0
    %301 = vmatpush1.msra.mxu0 0.0
    %302 = vmatprep.subr.mxu0 0.0
    %303 = vmatpush1.msra.mxu0 0.0
    %304 = vmatprep.subr.mxu0 0.0
    %305 = vmatpush1.msra.mxu0 0.0
    %306 = vmatprep.subr.mxu0 0.0
    %307 = vmatpush1.msra.mxu0 0.0
    %308 = vmatprep.subr.mxu0 0.0
    %309 = vmatpush1.msra.mxu0 0.0
    %310 = vmatprep.subr.mxu0 0.0
    %311 = vmatpush1.msra.mxu0 0.0
    %312 = vmatprep.subr.mxu0 0.0
    %313 = vmatpush1.msra.mxu0 0.0
    %314 = vmatprep.subr.mxu0 0.0
    %315 = vmatpush1.msra.mxu0 0.0
    %316 = vmatprep.subr.mxu0 0.0
    %317 = vmatpush1.msra.mxu0 %v274
    %318 = vmatprep.subr.mxu0 0.0
    %319 = vmatpush2.msra.mxu0 0.0
    %320 = vmatprep.subr.mxu0 0.0
    %321 = vmatpush2.msra.mxu0 0.0
    %322 = vmatprep.subr.mxu0 0.0
    %323 = vmatpush2.msra.mxu0 0.0
    %324 = vmatprep.subr.mxu0 0.0
    %325 = vmatpush2.msra.mxu0 0.0
    %326 = vmatprep.subr.mxu0 0.0
    %327 = vmatpush2.msra.mxu0 0.0
    %328 = vmatprep.subr.mxu0 0.0
    %329 = vmatpush2.msra.mxu0 0.0
    %330 = vmatprep.subr.mxu0 0.0
    %331 = vmatpush2.msra.mxu0 0.0
    %332 = vmatprep.subr.mxu0 0.0
    %333 = vmatpush2.msra.mxu0 0.0
    %334 = vmatprep.subr.mxu0 0.0
    %335 = vmatpush2.msra.mxu0 0.0
    %336 = vmatprep.subr.mxu0 0.0
    %337 = vmatpush2.msra.mxu0 0.0
    %338 = vmatprep.subr.mxu0 0.0
    %339 = vmatpush2.msra.mxu0 0.0
    %340 = vmatprep.subr.mxu0 0.0
    %341 = vmatpush2.msra.mxu0 0.0
    %342 = vmatprep.subr.mxu0 0.0
    %343 = vmatpush2.msra.mxu0 0.0
    %344 = vmatprep.subr.mxu0 0.0
    %345 = vmatpush2.msra.mxu0 0.0
    %346 = vmatprep.subr.mxu0 0.0
    %347 = vmatpush2.msra.mxu0 0.0
    %348 = vmatprep.subr.mxu0 0.0
    %349 = vmatpush2.msra.mxu0 0.0
    %350 = vmatprep.mubr.f32.mxu0 0.0
    %351 = vmatmul.mubr.f32.gmra.mxu0 %v284
    %v352 = vpop.f32.mrf.mxu0
    %v353 = vadd.f32 %v280, %v352
    %v354 = vpop.f32.mrf.mxu0
    %355 = vdwg.mxu0
    %v356 = vsub.f32 0.0, %v353
    %v357 = vmul.f32 %v356, 1.442695
    %v358 = vpow.pop %v357
    %v359 = vadd.f32 %v358, 1.0
    %v360 = vrcp.pop %v359
    %v361 = vmul.f32 1.0, %v360
    %v364 = vunpack.c.l.s4 1966171168
    %v365 = vunpack.c.0.s8 %v364
    %v366 = vlaneseq
    %v367 = vshrl.u32 %v366, 7
    %v368 = vsub.s32 %v365, %v367
    %v369 = vrot.slane %v361, %v368
    %v370 = vcombine.high %v369, %v369
    %v372 = vunpack.c.l.s4 1966171168
    %v373 = vunpack.c.0.s8 %v372
    %v374 = vlaneseq
    %v375 = vshrl.u32 %v374, 7
    %v376 = vsub.s32 %v373, %v375
    %v377 = vrot.slane %v369, %v376
    %v379 = vunpack.c.l.s4 1966171168
    %v380 = vunpack.c.0.s8 %v379
    %v381 = vlaneseq
    %v382 = vshrl.u32 %v381, 7
    %v383 = vsub.s32 %v380, %v382
    %v384 = vrot.slane %v370, %v383
    %v385 = vlaneseq
    %v386 = vshrl.u32 %v385, 7
    %v387 = vsub.s32 0, %v386
    %v388 = vrot.slane %v377, %v387
    %v389 = vlaneseq
    %v390 = vshrl.u32 %v389, 7
    %v391 = vsub.s32 0, %v390
    %v392 = vrot.slane %v384, %v391
    %v395 = vmul.f32 %v35, %v388
    %v396 = vmul.f32 %v36, %v388
    %v397 = vmul.f32 %v37, %v388
    %v398 = vmul.f32 %v38, %v388
    %v399 = vmul.f32 %v39, %v388
    %v400 = vmul.f32 %v40, %v388
    %v401 = vmul.f32 %v41, %v388
    %v402 = vmul.f32 %v42, %v388
    %v403 = vmul.f32 %v43, %v388
    %v404 = vmul.f32 %v44, %v388
    %v405 = vmul.f32 %v45, %v388
    %v406 = vmul.f32 %v46, %v388
    %v407 = vmul.f32 %v47, %v388
    %v408 = vmul.f32 %v48, %v388
    %v409 = vmul.f32 %v49, %v388
    %v410 = vmul.f32 %v50, %v388
    %v411 = vmul.f32 %v51, %v388
    %v412 = vmul.f32 %v52, %v388
    %v413 = vmul.f32 %v53, %v388
    %v414 = vmul.f32 %v54, %v388
    %v415 = vmul.f32 %v55, %v388
    %v416 = vmul.f32 %v56, %v388
    %v417 = vmul.f32 %v57, %v388
    %v418 = vmul.f32 %v58, %v388
    %v419 = vmul.f32 %v59, %v388
    %v420 = vmul.f32 %v60, %v388
    %v421 = vmul.f32 %v61, %v388
    %v422 = vmul.f32 %v62, %v388
    %v423 = vmul.f32 %v63, %v388
    %v424 = vmul.f32 %v64, %v388
    %v425 = vmul.f32 %v65, %v388
    %v426 = vmul.f32 %v66, %v388
    %v427 = vmul.f32 %v67, %v392
    %v428 = vmul.f32 %v68, %v392
    %v429 = vmul.f32 %v69, %v392
    %v430 = vmul.f32 %v70, %v392
    %v431 = vmul.f32 %v71, %v392
    %v432 = vmul.f32 %v72, %v392
    %v433 = vmul.f32 %v73, %v392
    %v434 = vmul.f32 %v74, %v392
    %v435 = vmul.f32 %v75, %v392
    %v436 = vmul.f32 %v76, %v392
    %v437 = vmul.f32 %v77, %v392
    %v438 = vmul.f32 %v78, %v392
    %v439 = vmul.f32 %v79, %v392
    %v440 = vmul.f32 %v80, %v392
    %v441 = vmul.f32 %v81, %v392
    %v442 = vmul.f32 %v82, %v392
    %v443 = vmul.f32 %v83, %v392
    %v444 = vmul.f32 %v84, %v392
    %v445 = vmul.f32 %v85, %v392
    %v446 = vmul.f32 %v86, %v392
    %v447 = vmul.f32 %v87, %v392
    %v448 = vmul.f32 %v88, %v392
    %v449 = vmul.f32 %v89, %v392
    %v450 = vmul.f32 %v90, %v392
    %v451 = vmul.f32 %v91, %v392
    %v452 = vmul.f32 %v92, %v392
    %v453 = vmul.f32 %v93, %v392
    %v454 = vmul.f32 %v94, %v392
    %v455 = vmul.f32 %v95, %v392
    %v456 = vmul.f32 %v96, %v392
    %v457 = vmul.f32 %v97, %v392
    %v458 = vmul.f32 %v98, %v392
    %459 = vst [vmem:[#allocation5] sm:$0xff] %v395
    %460 = vst [vmem:[#allocation5 + $0x8] sm:$0xff] %v396
    %461 = vst [vmem:[#allocation5 + $0x10] sm:$0xff] %v397
    %462 = vst [vmem:[#allocation5 + $0x18] sm:$0xff] %v398
    %463 = vst [vmem:[#allocation5 + $0x20] sm:$0xff] %v399
    %464 = vst [vmem:[#allocation5 + $0x28] sm:$0xff] %v400
    %465 = vst [vmem:[#allocation5 + $0x30] sm:$0xff] %v401
    %466 = vst [vmem:[#allocation5 + $0x38] sm:$0xff] %v402
    %467 = vst [vmem:[#allocation5 + $0x40] sm:$0xff] %v403
    %468 = vst [vmem:[#allocation5 + $0x48] sm:$0xff] %v404
    %469 = vst [vmem:[#allocation5 + $0x50] sm:$0xff] %v405
    %470 = vst [vmem:[#allocation5 + $0x58] sm:$0xff] %v406
    %471 = vst [vmem:[#allocation5 + $0x60] sm:$0xff] %v407
    %472 = vst [vmem:[#allocation5 + $0x68] sm:$0xff] %v408
    %473 = vst [vmem:[#allocation5 + $0x70] sm:$0xff] %v409
    %474 = vst [vmem:[#allocation5 + $0x78] sm:$0xff] %v410
    %475 = vst [vmem:[#allocation5 + $0x80] sm:$0xff] %v411
    %476 = vst [vmem:[#allocation5 + $0x88] sm:$0xff] %v412
    %477 = vst [vmem:[#allocation5 + $0x90] sm:$0xff] %v413
    %478 = vst [vmem:[#allocation5 + $0x98] sm:$0xff] %v414
    %479 = vst [vmem:[#allocation5 + $0xa0] sm:$0xff] %v415
    %480 = vst [vmem:[#allocation5 + $0xa8] sm:$0xff] %v416
    %481 = vst [vmem:[#allocation5 + $0xb0] sm:$0xff] %v417
    %482 = vst [vmem:[#allocation5 + $0xb8] sm:$0xff] %v418
    %483 = vst [vmem:[#allocation5 + $0xc0] sm:$0xff] %v419
    %484 = vst [vmem:[#allocation5 + $0xc8] sm:$0xff] %v420
    %485 = vst [vmem:[#allocation5 + $0xd0] sm:$0xff] %v421
    %486 = vst [vmem:[#allocation5 + $0xd8] sm:$0xff] %v422
    %487 = vst [vmem:[#allocation5 + $0xe0] sm:$0xff] %v423
    %488 = vst [vmem:[#allocation5 + $0xe8] sm:$0xff] %v424
    %489 = vst [vmem:[#allocation5 + $0xf0] sm:$0xff] %v425
    %490 = vst [vmem:[#allocation5 + $0xf8] sm:$0xff] %v426
    %491 = vst [vmem:[#allocation5 + $0x100] sm:$0xff] %v427
    %492 = vst [vmem:[#allocation5 + $0x108] sm:$0xff] %v428
    %493 = vst [vmem:[#allocation5 + $0x110] sm:$0xff] %v429
    %494 = vst [vmem:[#allocation5 + $0x118] sm:$0xff] %v430
    %495 = vst [vmem:[#allocation5 + $0x120] sm:$0xff] %v431
    %496 = vst [vmem:[#allocation5 + $0x128] sm:$0xff] %v432
    %497 = vst [vmem:[#allocation5 + $0x130] sm:$0xff] %v433
    %498 = vst [vmem:[#allocation5 + $0x138] sm:$0xff] %v434
    %499 = vst [vmem:[#allocation5 + $0x140] sm:$0xff] %v435
    %500 = vst [vmem:[#allocation5 + $0x148] sm:$0xff] %v436
    %501 = vst [vmem:[#allocation5 + $0x150] sm:$0xff] %v437
    %502 = vst [vmem:[#allocation5 + $0x158] sm:$0xff] %v438
    %503 = vst [vmem:[#allocation5 + $0x160] sm:$0xff] %v439
    %504 = vst [vmem:[#allocation5 + $0x168] sm:$0xff] %v440
    %505 = vst [vmem:[#allocation5 + $0x170] sm:$0xff] %v441
    %506 = vst [vmem:[#allocation5 + $0x178] sm:$0xff] %v442
    %507 = vst [vmem:[#allocation5 + $0x180] sm:$0xff] %v443
    %508 = vst [vmem:[#allocation5 + $0x188] sm:$0xff] %v444
    %509 = vst [vmem:[#allocation5 + $0x190] sm:$0xff] %v445
    %510 = vst [vmem:[#allocation5 + $0x198] sm:$0xff] %v446
    %511 = vst [vmem:[#allocation5 + $0x1a0] sm:$0xff] %v447
    %512 = vst [vmem:[#allocation5 + $0x1a8] sm:$0xff] %v448
    %513 = vst [vmem:[#allocation5 + $0x1b0] sm:$0xff] %v449
    %514 = vst [vmem:[#allocation5 + $0x1b8] sm:$0xff] %v450
    %515 = vst [vmem:[#allocation5 + $0x1c0] sm:$0xff] %v451
    %516 = vst [vmem:[#allocation5 + $0x1c8] sm:$0xff] %v452
    %517 = vst [vmem:[#allocation5 + $0x1d0] sm:$0xff] %v453
    %518 = vst [vmem:[#allocation5 + $0x1d8] sm:$0xff] %v454
    %519 = vst [vmem:[#allocation5 + $0x1e0] sm:$0xff] %v455
    %520 = vst [vmem:[#allocation5 + $0x1e8] sm:$0xff] %v456
    %521 = vst [vmem:[#allocation5 + $0x1f0] sm:$0xff] %v457
    %522 = vst [vmem:[#allocation5 + $0x1f8] sm:$0xff] %v458
    // Predicated region
    $region26: #{tpu_custom_call.1} parent=1 // pred_check
      _
    $region27: #{tpu_custom_call.1} parent=1 // pred_check_branch
      %524 = sbr.rel (0) target = $region29
    $region28: #{tpu_custom_call.1} parent=1 // pred_region
      %s526 = ssub.s32 8192, 8192
      %527 = vsyncadd [#allocation4], %s526
      %s528 = sshll.u32 [#allocation5], 4
      %s529 = int_to_ptr.vmem [resolvable:$true] %s528
      %534 = dma.vmem_to_hbm [thread:$0]  %s529, 8192, %s5, [#allocation4], 128, 128, 8
    $region29: #{tpu_custom_call.1} parent=1 // pred_fallthru
      _
    // Predicated region
    $region30: #{tpu_custom_call.1} parent=1 // pred_check
      _
    $region31: #{tpu_custom_call.1} parent=1 // pred_check_branch
      %536 = sbr.rel (0) target = $region33
    $region32: #{tpu_custom_call.1} parent=1 // pred_region
      %537 = dma.done [#allocation4], 8192
    $region33: #{tpu_custom_call.1} parent=1 // pred_fallthru
      _
    %538 = vsyncpa [#allocation3], 1
    %539 = vsyncpa [#allocation4], 1

</llo_original>
